<compile_context>
chip_gen: v7x
topology: tpu7x:2x2x1
jax: 0.10.0
libtpu: 0.0.40
codegen_flags: <defaults>
</compile_context>

<pallas_src>
import math

import jax
import jax.numpy as jnp
from jax.experimental import pallas as pl
from jax.experimental.pallas import tpu as pltpu


# ----------------------------------------------------------------------------
# Fused GraphNet kernel: one grid step == one batch element, full forward pass.
# ----------------------------------------------------------------------------
def _graphnet_kernel(x_ref, a_ref, w1_ref, b1_ref, w2_ref, b2_ref, o_ref):
    n = a_ref.shape[0]
    A = a_ref[...]                                               # [N, N]

    # laplacian_batch: D_hat = (sum(A_hat, dim=1) + 1e-5)^-1/2 (identical per
    # batch element since A_hat is broadcast), L = diag(D) @ A_hat @ diag(D).
    deg = jnp.sum(A, axis=0, keepdims=True) + 1e-5               # [1, N]
    dh = jax.lax.rsqrt(deg)                                      # [1, N]
    rows = jax.lax.broadcasted_iota(jnp.int32, (n, n), 0)
    cols = jax.lax.broadcasted_iota(jnp.int32, (n, n), 1)
    eye = (rows == cols).astype(jnp.float32)
    dmat = eye * dh                                              # diag(D^-1/2)
    L = jnp.dot(dmat, A * dh, preferred_element_type=jnp.float32)  # [N, N]

    x = x_ref[0]                                                 # [N, Cin]

    # gconv1: ReLU(fc1(L @ x))  — computed as L @ (x @ W1) + b1 (wider lanes).
    h = jnp.dot(x, w1_ref[...], preferred_element_type=jnp.float32)
    h = jnp.dot(L, h, preferred_element_type=jnp.float32) + b1_ref[...]
    h = jnp.maximum(h, 0.0)                                      # [N, 2*Cin]

    # gconv2: ReLU(fc2(L @ h)).
    y = jnp.dot(h, w2_ref[...], preferred_element_type=jnp.float32)
    y = jnp.dot(L, y, preferred_element_type=jnp.float32) + b2_ref[...]
    y = jnp.maximum(y, 0.0)                                      # [N, Cout]

    o_ref[0] = y.astype(o_ref.dtype)


def graphnet_forward(x, A_hat, W1, b1, W2, b2):
    """Full GraphNet forward in a single pallas_call.

    x      : [B, N, Cin]
    A_hat  : [N, N]        (learnable adjacency parameter)
    W1, b1 : [Cin, 2*Cin], [2*Cin]
    W2, b2 : [2*Cin, Cout], [Cout]
    returns: [B, N, Cout]
    """
    B, N, Cin = x.shape
    H = W1.shape[1]
    Cout = W2.shape[1]
    b1 = b1.reshape(1, H)
    b2 = b2.reshape(1, Cout)

    return pl.pallas_call(
        _graphnet_kernel,
        out_shape=jax.ShapeDtypeStruct((B, N, Cout), jnp.float32),
        grid=(B,),
        in_specs=[
            pl.BlockSpec((1, N, Cin), lambda i: (i, 0, 0)),   # per-batch activation
            pl.BlockSpec((N, N), lambda i: (0, 0)),           # A_hat (VMEM-resident)
            pl.BlockSpec((Cin, H), lambda i: (0, 0)),         # W1
            pl.BlockSpec((1, H), lambda i: (0, 0)),           # b1
            pl.BlockSpec((H, Cout), lambda i: (0, 0)),        # W2
            pl.BlockSpec((1, Cout), lambda i: (0, 0)),        # b2
        ],
        out_specs=pl.BlockSpec((1, N, Cout), lambda i: (i, 0, 0)),
        compiler_params=pltpu.CompilerParams(
            dimension_semantics=("parallel",)),                # megacore split on v7x
    )(x, A_hat, W1, b1, W2, b2)


# ----------------------------------------------------------------------------
# Pure-JAX reference (mirrors the PyTorch module) for a sanity check.
# ----------------------------------------------------------------------------
def graphnet_reference(x, A_hat, W1, b1, W2, b2):
    d = jax.lax.rsqrt(jnp.sum(A_hat, axis=0) + 1e-5)
    L = d[:, None] * A_hat * d[None, :]
    h = jax.nn.relu(jnp.einsum("ij,bjc->bic", L, x) @ W1 + b1)
    y = jax.nn.relu(jnp.einsum("ij,bjc->bic", L, h) @ W2 + b2)
    return y


# ----------------------------------------------------------------------------
# Deterministic synthetic parameters (PyTorch-style init).
# ----------------------------------------------------------------------------
def init_params(key, in_features=2, out_features=2, n_pts=21):
    k1, k2, k3, k4, k5 = jax.random.split(key, 5)
    hid = in_features * 2

    def linear(kw, kb, fin, fout):
        bound = 1.0 / math.sqrt(fin)
        W = jax.random.uniform(kw, (fin, fout), jnp.float32, -bound, bound)
        b = jax.random.uniform(kb, (fout,), jnp.float32, -bound, bound)
        return W, b

    W1, b1 = linear(k1, k2, in_features, hid)
    W2, b2 = linear(k3, k4, hid, out_features)

    # A_hat is initialized to identity in the module; add a small non-negative
    # perturbation (as if learned) so the laplacian normalization is exercised.
    A_hat = jnp.eye(n_pts, dtype=jnp.float32) + 0.05 * jax.random.uniform(
        k5, (n_pts, n_pts), jnp.float32)
    return A_hat, W1, b1, W2, b2


# ----------------------------------------------------------------------------
if __name__ == "__main__":
    B, n_pts, in_features, out_features = 2, 21, 2, 2

    key = jax.random.PRNGKey(0)
    kx, kp = jax.random.split(key)

    x = jax.random.normal(kx, (B, n_pts, in_features), jnp.float32)
    A_hat, W1, b1, W2, b2 = init_params(kp, in_features, out_features, n_pts)

    fwd = jax.jit(graphnet_forward)
    out = fwd(x, A_hat, W1, b1, W2, b2)
    jax.block_until_ready(out)

    assert out.shape == (B, n_pts, out_features)
    assert bool(jnp.all(jnp.isfinite(out)))

    ref = graphnet_reference(x, A_hat, W1, b1, W2, b2)
    max_err = float(jnp.max(jnp.abs(out - ref)))
    assert bool(jnp.allclose(out, ref, atol=1e-2, rtol=1e-2)), max_err

    print("KERNEL_OK")
</pallas_src>

<mosaic_0001>
module attributes {stable_mosaic.version = 11 : i64} {
  func.func @_graphnet_kernel(%arg0: i32, %arg1: memref<1x21x2xf32, #tpu.memory_space<vmem>>, %arg2: memref<21x21xf32, #tpu.memory_space<vmem>>, %arg3: memref<2x4xf32, #tpu.memory_space<vmem>>, %arg4: memref<1x4xf32, #tpu.memory_space<vmem>>, %arg5: memref<4x2xf32, #tpu.memory_space<vmem>>, %arg6: memref<1x2xf32, #tpu.memory_space<vmem>>, %arg7: memref<1x21x2xf32, #tpu.memory_space<vmem>>) attributes {dimension_semantics = [#tpu.dimension_semantics<parallel>], iteration_bounds = array<i64: 2>, scalar_prefetch = 0 : i64, scratch_operands = 0 : i64, tpu.core_type = #tpu.core_type<tc>, window_params = [{transform_indices = @transform_0, window_bounds = array<i64: 1, 21, 2>}, {pipeline_mode = #tpu.pipeline_mode<synchronous>, transform_indices = @transform_1, window_bounds = array<i64: 21, 21>}, {pipeline_mode = #tpu.pipeline_mode<synchronous>, transform_indices = @transform_2, window_bounds = array<i64: 2, 4>}, {pipeline_mode = #tpu.pipeline_mode<synchronous>, transform_indices = @transform_3, window_bounds = array<i64: 1, 4>}, {pipeline_mode = #tpu.pipeline_mode<synchronous>, transform_indices = @transform_4, window_bounds = array<i64: 4, 2>}, {pipeline_mode = #tpu.pipeline_mode<synchronous>, transform_indices = @transform_5, window_bounds = array<i64: 1, 2>}, {transform_indices = @transform_6, window_bounds = array<i64: 1, 21, 2>}]} {
    %c0 = arith.constant 0 : index
    %c0_0 = arith.constant 0 : index
    %0 = vector.load %arg2[%c0, %c0_0] : memref<21x21xf32, #tpu.memory_space<vmem>>, vector<21x21xf32>
    %cst = arith.constant dense<0.000000e+00> : vector<21xf32>
    %1 = vector.multi_reduction <add>, %0, %cst [0] : vector<21x21xf32> to vector<21xf32>
    %2 = vector.shape_cast %1 : vector<21xf32> to vector<1x21xf32>
    %cst_1 = arith.constant 9.99999974E-6 : f32
    %3 = vector.broadcast %cst_1 : f32 to vector<1x21xf32>
    %4 = arith.addf %2, %3 : vector<1x21xf32>
    %5 = math.rsqrt %4 : vector<1x21xf32>
    %6 = tpu.iota {dimensions = array<i32: 0>} : vector<21x21xi32>
    %7 = tpu.iota {dimensions = array<i32: 1>} : vector<21x21xi32>
    %8 = arith.cmpi eq, %6, %7 : vector<21x21xi32>
    %9 = arith.extui %8 : vector<21x21xi1> to vector<21x21xi32>
    %10 = arith.sitofp %9 : vector<21x21xi32> to vector<21x21xf32>
    %11 = vector.broadcast %5 : vector<1x21xf32> to vector<21x21xf32>
    %12 = arith.mulf %10, %11 : vector<21x21xf32>
    %13 = vector.broadcast %5 : vector<1x21xf32> to vector<21x21xf32>
    %14 = arith.mulf %0, %13 : vector<21x21xf32>
    %cst_2 = arith.constant dense<0.000000e+00> : vector<21x21xf32>
    %15 = tpu.matmul %12, %14, %cst_2 {dimension_numbers = #tpu.dot_dimension_numbers<[1], [0], [0], [1], [0, 0, 1, 1], [], []>} : vector<21x21xf32>, vector<21x21xf32>, vector<21x21xf32> -> vector<21x21xf32>
    %c0_3 = arith.constant 0 : index
    %c0_4 = arith.constant 0 : index
    %c0_5 = arith.constant 0 : index
    %16 = vector.load %arg1[%c0_3, %c0_4, %c0_5] : memref<1x21x2xf32, #tpu.memory_space<vmem>>, vector<1x21x2xf32>
    %17 = vector.shape_cast %16 : vector<1x21x2xf32> to vector<21x2xf32>
    %c0_6 = arith.constant 0 : index
    %c0_7 = arith.constant 0 : index
    %18 = vector.load %arg3[%c0_6, %c0_7] : memref<2x4xf32, #tpu.memory_space<vmem>>, vector<2x4xf32>
    %cst_8 = arith.constant dense<0.000000e+00> : vector<21x4xf32>
    %19 = tpu.matmul %17, %18, %cst_8 {dimension_numbers = #tpu.dot_dimension_numbers<[1], [0], [0], [1], [0, 0, 1, 1], [], []>} : vector<21x2xf32>, vector<2x4xf32>, vector<21x4xf32> -> vector<21x4xf32>
    %cst_9 = arith.constant dense<0.000000e+00> : vector<21x4xf32>
    %20 = tpu.matmul %15, %19, %cst_9 {dimension_numbers = #tpu.dot_dimension_numbers<[1], [0], [0], [1], [0, 0, 1, 1], [], []>} : vector<21x21xf32>, vector<21x4xf32>, vector<21x4xf32> -> vector<21x4xf32>
    %c0_10 = arith.constant 0 : index
    %c0_11 = arith.constant 0 : index
    %21 = vector.load %arg4[%c0_10, %c0_11] : memref<1x4xf32, #tpu.memory_space<vmem>>, vector<1x4xf32>
    %22 = vector.broadcast %21 : vector<1x4xf32> to vector<21x4xf32>
    %23 = arith.addf %20, %22 : vector<21x4xf32>
    %cst_12 = arith.constant 0.000000e+00 : f32
    %24 = vector.broadcast %cst_12 : f32 to vector<21x4xf32>
    %25 = arith.maximumf %23, %24 : vector<21x4xf32>
    %c0_13 = arith.constant 0 : index
    %c0_14 = arith.constant 0 : index
    %26 = vector.load %arg5[%c0_13, %c0_14] : memref<4x2xf32, #tpu.memory_space<vmem>>, vector<4x2xf32>
    %cst_15 = arith.constant dense<0.000000e+00> : vector<21x2xf32>
    %27 = tpu.matmul %25, %26, %cst_15 {dimension_numbers = #tpu.dot_dimension_numbers<[1], [0], [0], [1], [0, 0, 1, 1], [], []>} : vector<21x4xf32>, vector<4x2xf32>, vector<21x2xf32> -> vector<21x2xf32>
    %cst_16 = arith.constant dense<0.000000e+00> : vector<21x2xf32>
    %28 = tpu.matmul %15, %27, %cst_16 {dimension_numbers = #tpu.dot_dimension_numbers<[1], [0], [0], [1], [0, 0, 1, 1], [], []>} : vector<21x21xf32>, vector<21x2xf32>, vector<21x2xf32> -> vector<21x2xf32>
    %c0_17 = arith.constant 0 : index
    %c0_18 = arith.constant 0 : index
    %29 = vector.load %arg6[%c0_17, %c0_18] : memref<1x2xf32, #tpu.memory_space<vmem>>, vector<1x2xf32>
    %30 = vector.broadcast %29 : vector<1x2xf32> to vector<21x2xf32>
    %31 = arith.addf %28, %30 : vector<21x2xf32>
    %cst_19 = arith.constant 0.000000e+00 : f32
    %32 = vector.broadcast %cst_19 : f32 to vector<21x2xf32>
    %33 = arith.maximumf %31, %32 : vector<21x2xf32>
    %c0_20 = arith.constant 0 : index
    %c0_21 = arith.constant 0 : index
    %c0_22 = arith.constant 0 : index
    %34 = vector.load %arg7[%c0_20, %c0_21, %c0_22] : memref<1x21x2xf32, #tpu.memory_space<vmem>>, vector<1x21x2xf32>
    %35 = vector.shape_cast %34 : vector<1x21x2xf32> to vector<21x2xf32>
    %36 = vector.shape_cast %33 : vector<21x2xf32> to vector<1x21x2xf32>
    tpu.vector_store %arg7[%c0_20, %c0_21, %c0_22], %36 {strides = array<i32>} : memref<1x21x2xf32, #tpu.memory_space<vmem>>, vector<1x21x2xf32>,
    return
  }
  func.func @transform_0(%arg0: i32) -> (i32, i32, i32) {
    %c0_i32 = arith.constant 0 : i32
    %c0_i32_0 = arith.constant 0 : i32
    %c0_i32_1 = arith.constant 0 : i32
    return %arg0, %c0_i32, %c0_i32_0 : i32, i32, i32
  }
  func.func @transform_1(%arg0: i32) -> (i32, i32) {
    %c0_i32 = arith.constant 0 : i32
    %c0_i32_0 = arith.constant 0 : i32
    %c0_i32_1 = arith.constant 0 : i32
    return %c0_i32, %c0_i32_0 : i32, i32
  }
  func.func @transform_2(%arg0: i32) -> (i32, i32) {
    %c0_i32 = arith.constant 0 : i32
    %c0_i32_0 = arith.constant 0 : i32
    %c0_i32_1 = arith.constant 0 : i32
    return %c0_i32, %c0_i32_0 : i32, i32
  }
  func.func @transform_3(%arg0: i32) -> (i32, i32) {
    %c0_i32 = arith.constant 0 : i32
    %c0_i32_0 = arith.constant 0 : i32
    %c0_i32_1 = arith.constant 0 : i32
    return %c0_i32, %c0_i32_0 : i32, i32
  }
  func.func @transform_4(%arg0: i32) -> (i32, i32) {
    %c0_i32 = arith.constant 0 : i32
    %c0_i32_0 = arith.constant 0 : i32
    %c0_i32_1 = arith.constant 0 : i32
    return %c0_i32, %c0_i32_0 : i32, i32
  }
  func.func @transform_5(%arg0: i32) -> (i32, i32) {
    %c0_i32 = arith.constant 0 : i32
    %c0_i32_0 = arith.constant 0 : i32
    %c0_i32_1 = arith.constant 0 : i32
    return %c0_i32, %c0_i32_0 : i32, i32
  }
  func.func @transform_6(%arg0: i32) -> (i32, i32, i32) {
    %c0_i32 = arith.constant 0 : i32
    %c0_i32_0 = arith.constant 0 : i32
    %c0_i32_1 = arith.constant 0 : i32
    return %arg0, %c0_i32, %c0_i32_0 : i32, i32, i32
  }
}

</mosaic_0001>

<llo_original>
// kernel: graphnet_forward.1
$region0: #{graphnet_forward.1}
  #allocation0 [shape = 'u32[]', space=smem, size = 0x4, offset = 0x4, fixed_abs, tag = 'smem constant byte address 0x4 - core index']
  #allocation1 [shape = 'u32[144,128]{1,0:T(1,128)}', space=vmem, size = 0x12000, scoped, tag = 'internal scratch']
  %s0 = inlined_call_operand.vmem [shape: f32[2,21,2], index: 0, kind: input, shape index: {}]
  %s1 = inlined_call_operand.vmem [shape: f32[21,21], index: 1, kind: input, shape index: {}]
  %s2 = inlined_call_operand.vmem [shape: f32[2,4], index: 2, kind: input, shape index: {}]
  %s3 = inlined_call_operand.vmem [shape: f32[1,4], index: 3, kind: input, shape index: {}]
  %s4 = inlined_call_operand.vmem [shape: f32[4,2], index: 4, kind: input, shape index: {}]
  %s5 = inlined_call_operand.vmem [shape: f32[1,2], index: 5, kind: input, shape index: {}]
  %s6 = inlined_call_operand.vmem [shape: f32[2,21,2], index: 6, kind: output, shape index: {}]
  %s7 = sld [smem:[#allocation0]]
  $region57: #{graphnet_forward.1} parent=0
    _
  %s9 = ssub.s32 1, %s7
  %s10 = scalar_select 0, %s9, %s7
  loop: start=0, step=1, limit=4
  $region2: #{graphnet_forward.1} parent=0 // loop_pre_header
    _
  $region3: #{graphnet_forward.1} parent=0 // loop_header
    %s12 = sphi 0, %s16
    %p13 = scmp.ge.s32.totalorder %s12, 4
    %s22 = sphi 0, %s24
    %s25 = sphi 0, %s22
    %s26 = sphi 0, %s25
    %s42 = sphi 0, %s26
    %s46 = sphi 0, %s46
    %s48 = sphi 0, %s46
    %s49 = sphi 0, %s48
    %s63 = sphi 0, %s49
    %s67 = sphi 0, %s67
    %s69 = sphi 0, %s67
    %s70 = sphi 0, %s69
    %s84 = sphi 0, %s70
    %s88 = sphi 0, %s88
    %s90 = sphi 0, %s88
    %s91 = sphi 0, %s90
    %s105 = sphi 0, %s91
    %s109 = sphi 0, %s109
    %s111 = sphi 0, %s109
    %s112 = sphi 0, %s111
    %s126 = sphi 0, %s112
    %s130 = sphi 0, %s130
    %s132 = sphi 0, %s130
    %s133 = sphi 0, %s132
    %s147 = sphi 0, %s133
    %s153 = sphi 0, %s155
    %s156 = sphi 0, %s153
    %s157 = sphi 0, %s156
    %s173 = sphi 0, %s157
  $region4: #{graphnet_forward.1} parent=0 // loop_header_branch
    %15 = sbr.rel (%p13) target = $region8
  $region5: #{graphnet_forward.1} parent=0 // loop_body
    %s17 = ssub.s32 %s12, 1
    %s18 = ssub.s32 %s12, 2
    %s19 = sadd.s32 %s12, 1
    %s20 = ssub.s32 %s12, %s19
    %p21 = scmp.eq.s32.totalorder %s20, 0
    %s23 = sadd.s32 %s22, 1
    %s24 = scalar_select %p21, %s22, %s23
    %p27 = pneg %p21
    %p28 = scmp.eq.s32.totalorder %s12, 1
    %p29 = por %p27, %p28
    %p30 = scmp.ne.s32.totalorder %s22, %s25
    %p31 = scmp.eq.s32.totalorder %s12, 0
    %p32 = por %p30, %p31
    %p33 = scmp.ne.s32.totalorder %s22, %s25
    %p34 = scmp.eq.s32.totalorder %s17, 1
    %p35 = por %p33, %p34
    %p36 = scmp.ne.s32.totalorder %s25, %s26
    %p37 = scmp.eq.s32.totalorder %s17, 0
    %p38 = por %p36, %p37
    %p39 = scmp.ne.s32.totalorder %s25, %s26
    %p40 = scmp.eq.s32.totalorder %s18, 1
    %p41 = por %p39, %p40
    %p43 = scmp.ne.s32.totalorder %s26, %s42
    %p44 = scmp.eq.s32.totalorder %s18, 0
    %p45 = por %p43, %p44
    %s47 = sadd.s32 %s46, 1
    %p50 = scmp.eq.s32.totalorder %s12, 1
    %p51 = scmp.ne.s32.totalorder %s46, %s48
    %p52 = scmp.eq.s32.totalorder %s12, 0
    %p53 = por %p51, %p52
    %p54 = scmp.ne.s32.totalorder %s46, %s48
    %p55 = scmp.eq.s32.totalorder %s17, 1
    %p56 = por %p54, %p55
    %p57 = scmp.ne.s32.totalorder %s48, %s49
    %p58 = scmp.eq.s32.totalorder %s17, 0
    %p59 = por %p57, %p58
    %p60 = scmp.ne.s32.totalorder %s48, %s49
    %p61 = scmp.eq.s32.totalorder %s18, 1
    %p62 = por %p60, %p61
    %p64 = scmp.ne.s32.totalorder %s49, %s63
    %p65 = scmp.eq.s32.totalorder %s18, 0
    %p66 = por %p64, %p65
    %s68 = sadd.s32 %s67, 1
    %p71 = scmp.eq.s32.totalorder %s12, 1
    %p72 = scmp.ne.s32.totalorder %s67, %s69
    %p73 = scmp.eq.s32.totalorder %s12, 0
    %p74 = por %p72, %p73
    %p75 = scmp.ne.s32.totalorder %s67, %s69
    %p76 = scmp.eq.s32.totalorder %s17, 1
    %p77 = por %p75, %p76
    %p78 = scmp.ne.s32.totalorder %s69, %s70
    %p79 = scmp.eq.s32.totalorder %s17, 0
    %p80 = por %p78, %p79
    %p81 = scmp.ne.s32.totalorder %s69, %s70
    %p82 = scmp.eq.s32.totalorder %s18, 1
    %p83 = por %p81, %p82
    %p85 = scmp.ne.s32.totalorder %s70, %s84
    %p86 = scmp.eq.s32.totalorder %s18, 0
    %p87 = por %p85, %p86
    %s89 = sadd.s32 %s88, 1
    %p92 = scmp.eq.s32.totalorder %s12, 1
    %p93 = scmp.ne.s32.totalorder %s88, %s90
    %p94 = scmp.eq.s32.totalorder %s12, 0
    %p95 = por %p93, %p94
    %p96 = scmp.ne.s32.totalorder %s88, %s90
    %p97 = scmp.eq.s32.totalorder %s17, 1
    %p98 = por %p96, %p97
    %p99 = scmp.ne.s32.totalorder %s90, %s91
    %p100 = scmp.eq.s32.totalorder %s17, 0
    %p101 = por %p99, %p100
    %p102 = scmp.ne.s32.totalorder %s90, %s91
    %p103 = scmp.eq.s32.totalorder %s18, 1
    %p104 = por %p102, %p103
    %p106 = scmp.ne.s32.totalorder %s91, %s105
    %p107 = scmp.eq.s32.totalorder %s18, 0
    %p108 = por %p106, %p107
    %s110 = sadd.s32 %s109, 1
    %p113 = scmp.eq.s32.totalorder %s12, 1
    %p114 = scmp.ne.s32.totalorder %s109, %s111
    %p115 = scmp.eq.s32.totalorder %s12, 0
    %p116 = por %p114, %p115
    %p117 = scmp.ne.s32.totalorder %s109, %s111
    %p118 = scmp.eq.s32.totalorder %s17, 1
    %p119 = por %p117, %p118
    %p120 = scmp.ne.s32.totalorder %s111, %s112
    %p121 = scmp.eq.s32.totalorder %s17, 0
    %p122 = por %p120, %p121
    %p123 = scmp.ne.s32.totalorder %s111, %s112
    %p124 = scmp.eq.s32.totalorder %s18, 1
    %p125 = por %p123, %p124
    %p127 = scmp.ne.s32.totalorder %s112, %s126
    %p128 = scmp.eq.s32.totalorder %s18, 0
    %p129 = por %p127, %p128
    %s131 = sadd.s32 %s130, 1
    %p134 = scmp.eq.s32.totalorder %s12, 1
    %p135 = scmp.ne.s32.totalorder %s130, %s132
    %p136 = scmp.eq.s32.totalorder %s12, 0
    %p137 = por %p135, %p136
    %p138 = scmp.ne.s32.totalorder %s130, %s132
    %p139 = scmp.eq.s32.totalorder %s17, 1
    %p140 = por %p138, %p139
    %p141 = scmp.ne.s32.totalorder %s132, %s133
    %p142 = scmp.eq.s32.totalorder %s17, 0
    %p143 = por %p141, %p142
    %p144 = scmp.ne.s32.totalorder %s132, %s133
    %p145 = scmp.eq.s32.totalorder %s18, 1
    %p146 = por %p144, %p145
    %p148 = scmp.ne.s32.totalorder %s133, %s147
    %p149 = scmp.eq.s32.totalorder %s18, 0
    %p150 = por %p148, %p149
    %s151 = ssub.s32 %s12, %s19
    %p152 = scmp.eq.s32.totalorder %s151, 0
    %s154 = sadd.s32 %s153, 1
    %s155 = scalar_select %p152, %s153, %s154
    %p158 = pneg %p152
    %p159 = scmp.eq.s32.totalorder %s12, 1
    %p160 = por %p158, %p159
    %p161 = scmp.ne.s32.totalorder %s153, %s156
    %p162 = scmp.eq.s32.totalorder %s12, 0
    %p163 = por %p161, %p162
    %p164 = scmp.ne.s32.totalorder %s153, %s156
    %p165 = scmp.eq.s32.totalorder %s17, 1
    %p166 = por %p164, %p165
    %p167 = scmp.ne.s32.totalorder %s156, %s157
    %p168 = scmp.eq.s32.totalorder %s17, 0
    %p169 = por %p167, %p168
    %p170 = scmp.ne.s32.totalorder %s156, %s157
    %p171 = scmp.eq.s32.totalorder %s18, 1
    %p172 = por %p170, %p171
    %p174 = scmp.ne.s32.totalorder %s157, %s173
    %p175 = scmp.eq.s32.totalorder %s18, 0
    %p176 = por %p174, %p175
    %p177 = scmp.le.s32.totalorder 1, %s12
    %p178 = scmp.lt.s32.totalorder %s12, 3
    %p179 = pnand %p177, %p178
    %p180 = pneg %p179
    // Predicated region
    $region9: #{graphnet_forward.1} parent=5 // pred_check
      _
    $region10: #{graphnet_forward.1} parent=5 // pred_check_branch
      %182 = sbr.rel (%p179) target = $region12
    $region11: #{graphnet_forward.1} parent=5 // pred_region
      %s183 = ssub.s32 %s12, 1
      // Predicated region
      $region13: #{graphnet_forward.1} parent=11 // pred_check
        %p184 = pneg %p59
      $region14: #{graphnet_forward.1} parent=11 // pred_check_branch
        %186 = sbr.rel (%p184) target = $region16
      $region15: #{graphnet_forward.1} parent=11 // pred_region
        _
      $region16: #{graphnet_forward.1} parent=11 // pred_fallthru
        _
      // Predicated region
      $region17: #{graphnet_forward.1} parent=11 // pred_check
        %p187 = pneg %p80
      $region18: #{graphnet_forward.1} parent=11 // pred_check_branch
        %189 = sbr.rel (%p187) target = $region20
      $region19: #{graphnet_forward.1} parent=11 // pred_region
        _
      $region20: #{graphnet_forward.1} parent=11 // pred_fallthru
        _
      // Predicated region
      $region21: #{graphnet_forward.1} parent=11 // pred_check
        %p190 = pneg %p101
      $region22: #{graphnet_forward.1} parent=11 // pred_check_branch
        %192 = sbr.rel (%p190) target = $region24
      $region23: #{graphnet_forward.1} parent=11 // pred_region
        _
      $region24: #{graphnet_forward.1} parent=11 // pred_fallthru
        _
      // Predicated region
      $region25: #{graphnet_forward.1} parent=11 // pred_check
        %p193 = pneg %p122
      $region26: #{graphnet_forward.1} parent=11 // pred_check_branch
        %195 = sbr.rel (%p193) target = $region28
      $region27: #{graphnet_forward.1} parent=11 // pred_region
        _
      $region28: #{graphnet_forward.1} parent=11 // pred_fallthru
        _
      // Predicated region
      $region29: #{graphnet_forward.1} parent=11 // pred_check
        %p196 = pneg %p143
      $region30: #{graphnet_forward.1} parent=11 // pred_check_branch
        %198 = sbr.rel (%p196) target = $region32
      $region31: #{graphnet_forward.1} parent=11 // pred_region
        _
      $region32: #{graphnet_forward.1} parent=11 // pred_fallthru
        _
    $region12: #{graphnet_forward.1} parent=5 // pred_fallthru
      _
    %p199 = scmp.lt.s32.totalorder %s12, 2
    // Predicated region
    $region33: #{graphnet_forward.1} parent=5 // pred_check
      %p200 = pneg %p199
    $region34: #{graphnet_forward.1} parent=5 // pred_check_branch
      %202 = sbr.rel (%p200) target = $region36
    $region35: #{graphnet_forward.1} parent=5 // pred_region
      // Predicated region
      $region37: #{graphnet_forward.1} parent=35 // pred_check
        %p203 = pneg %p32
      $region38: #{graphnet_forward.1} parent=35 // pred_check_branch
        %205 = sbr.rel (%p203) target = $region40
      $region39: #{graphnet_forward.1} parent=35 // pred_region
        %p206 = scmp.lt.s32.totalorder %s12, 1
        %s207 = scalar_select %p206, %s12, 1
        %s208 = smul.addr %s207, 3
        %s209 = smul.addr %s208, 8
        %s210 = scalar_lea.vmem %s0, %s209
      $region40: #{graphnet_forward.1} parent=35 // pred_fallthru
        _
    $region36: #{graphnet_forward.1} parent=5 // pred_fallthru
      _
    %p211 = scmp.le.s32.totalorder 1, %s12
    %p212 = scmp.lt.s32.totalorder %s12, 3
    %p213 = pnand %p211, %p212
    %p214 = pneg %p213
    // Predicated region
    $region41: #{graphnet_forward.1} parent=5 // pred_check
      _
    $region42: #{graphnet_forward.1} parent=5 // pred_check_branch
      %216 = sbr.rel (%p213) target = $region44
    $region43: #{graphnet_forward.1} parent=5 // pred_region
      %s217 = ssub.s32 %s12, 1
      %p218 = scmp.lt.s32.totalorder %s17, 1
      %s219 = scalar_select %p218, %s17, 1
      %s220 = smul.addr %s219, 3
      %s221 = smul.addr %s220, 8
      %s222 = scalar_lea.vmem %s0, %s221
      %p223 = pneg %p38
      %p224 = pneg %p35
      %p225 = pneg %p59
      %p226 = pneg %p56
      %p227 = pneg %p80
      %p228 = pneg %p77
      %p229 = pneg %p101
      %p230 = pneg %p98
      %p231 = pneg %p122
      %p232 = pneg %p119
      %p233 = pneg %p143
      %p234 = pneg %p140
      %p235 = pneg %p169
      %p236 = pneg %p166
      %p237 = scmp.lt.s32.totalorder %s17, 1
      %s238 = scalar_select %p237, %s17, 1
      %s239 = smul.addr %s238, 3
      %s240 = smul.addr %s239, 8
      %s241 = scalar_lea.vmem %s6, %s240
      %p242 = scmp.lt.s32.totalorder %s17, 1
      %s243 = scalar_select %p242, %s17, 1
      %s244 = smul.addr %s243, 3
      %s245 = smul.addr %s244, 8
      %s246 = scalar_lea.vmem %s0, %s245
      %p247 = scmp.lt.s32.totalorder %s17, 1
      %s248 = scalar_select %p247, %s17, 1
      %s249 = smul.addr %s248, 3
      %s250 = smul.addr %s249, 8
      %s251 = scalar_lea.vmem %s6, %s250
      %v252 = vld [vmem:[%s1] sm:$0xff]
      %v253 = vld [vmem:[%s1 + $0x8] sm:$0xff]
      %v254 = vld [vmem:[%s1 + $0x10] sm:$0x1f]
      %vm255 = vcmask 171008
      %v256 = vsel %vm255, %v252, 0.0
      %v257 = vsel %vm255, %v253, 0.0
      %v258 = vadd.f32 %v256, %v257
      %vm259 = vcmask 167936
      %v260 = vsel %vm259, %v254, 0.0
      %v261 = vadd.f32 %v258, %v260
      %v262 = vrot.slane %v261, 4
      %v263 = vadd.f32 %v261, %v262
      %v264 = vrot.slane %v263, 2
      %v265 = vadd.f32 %v263, %v264
      %v266 = vrot.slane %v265, 1
      %v267 = vadd.f32 %v265, %v266
      %v268 = vadd.f32 %v267, 1e-05
      %v269 = vrsqrt.pop %v268
      %v270 = vlaneseq
      %v271 = vshrl.u32 %v270, 7
      %v272 = vadd.s32 %v271, 8
      %v273 = vadd.s32 %v271, 16
      %v274 = vlaneseq
      %v275 = vand.u32 %v274, 127
      %vm276 = vcmp.eq.s32.totalorder %v271, %v275
      %vm277 = vcmp.eq.s32.totalorder %v272, %v275
      %vm278 = vcmp.eq.s32.totalorder %v273, %v275
      %v279 = vsel %vm276, 1, 0
      %v280 = vsel %vm277, 1, 0
      %v281 = vsel %vm278, 1, 0
      %v282 = vcvt.s32.f32 %v279
      %v283 = vcvt.s32.f32 %v280
      %v284 = vcvt.s32.f32 %v281
      %v285 = vmul.f32 %v282, %v269
      %v286 = vmul.f32 %v283, %v269
      %v287 = vmul.f32 %v284, %v269
      %v288 = vmul.f32 %v252, %v269
      %v289 = vmul.f32 %v253, %v269
      %v290 = vmul.f32 %v254, %v269
      %v292 = vsel %vm255, %v285, 0
      %v295 = vsel %vm255, %v286, 0
      %v298 = vsel %vm255, %v287, 0
      %vm300 = vcmask 1044480
      %v302 = vsel %vm300, %v290, 0
      %304 = vmatprep.subr.mxu0 0.0
      %305 = vmatpush1.msra.mxu0 %v288
      %306 = vmatprep.subr.mxu0 0.0
      %307 = vmatpush1.msra.mxu0 %v289
      %308 = vmatprep.subr.mxu0 0.0
      %309 = vmatpush1.msra.mxu0 %v302
      %310 = vmatprep.subr.mxu0 0.0
      %311 = vmatpush1.msra.mxu0 0.0
      %312 = vmatprep.subr.mxu0 0.0
      %313 = vmatpush1.msra.mxu0 0.0
      %314 = vmatprep.subr.mxu0 0.0
      %315 = vmatpush1.msra.mxu0 0.0
      %316 = vmatprep.subr.mxu0 0.0
      %317 = vmatpush1.msra.mxu0 0.0
      %318 = vmatprep.subr.mxu0 0.0
      %319 = vmatpush1.msra.mxu0 0.0
      %320 = vmatprep.subr.mxu0 0.0
      %321 = vmatpush1.msra.mxu0 0.0
      %322 = vmatprep.subr.mxu0 0.0
      %323 = vmatpush1.msra.mxu0 0.0
      %324 = vmatprep.subr.mxu0 0.0
      %325 = vmatpush1.msra.mxu0 0.0
      %326 = vmatprep.subr.mxu0 0.0
      %327 = vmatpush1.msra.mxu0 0.0
      %328 = vmatprep.subr.mxu0 0.0
      %329 = vmatpush1.msra.mxu0 0.0
      %330 = vmatprep.subr.mxu0 0.0
      %331 = vmatpush1.msra.mxu0 0.0
      %332 = vmatprep.subr.mxu0 0.0
      %333 = vmatpush1.msra.mxu0 0.0
      %334 = vmatprep.subr.mxu0 0.0
      %335 = vmatpush1.msra.mxu0 0.0
      %336 = vmatprep.subr.mxu0 0.0
      %337 = vmatpush1.msra.mxu0 0.0
      %338 = vmatprep.subr.mxu0 0.0
      %339 = vmatpush1.msra.mxu0 0.0
      %340 = vmatprep.subr.mxu0 0.0
      %341 = vmatpush1.msra.mxu0 0.0
      %342 = vmatprep.subr.mxu0 0.0
      %343 = vmatpush1.msra.mxu0 0.0
      %344 = vmatprep.subr.mxu0 0.0
      %345 = vmatpush1.msra.mxu0 0.0
      %346 = vmatprep.subr.mxu0 0.0
      %347 = vmatpush1.msra.mxu0 0.0
      %348 = vmatprep.subr.mxu0 0.0
      %349 = vmatpush1.msra.mxu0 0.0
      %350 = vmatprep.subr.mxu0 0.0
      %351 = vmatpush1.msra.mxu0 0.0
      %352 = vmatprep.subr.mxu0 0.0
      %353 = vmatpush1.msra.mxu0 0.0
      %354 = vmatprep.subr.mxu0 0.0
      %355 = vmatpush1.msra.mxu0 0.0
      %356 = vmatprep.subr.mxu0 0.0
      %357 = vmatpush1.msra.mxu0 0.0
      %358 = vmatprep.subr.mxu0 0.0
      %359 = vmatpush1.msra.mxu0 0.0
      %360 = vmatprep.subr.mxu0 0.0
      %361 = vmatpush1.msra.mxu0 0.0
      %362 = vmatprep.subr.mxu0 0.0
      %363 = vmatpush1.msra.mxu0 0.0
      %364 = vmatprep.subr.mxu0 0.0
      %365 = vmatpush1.msra.mxu0 0.0
      %366 = vmatprep.subr.mxu0 0.0
      %367 = vmatpush1.msra.mxu0 0.0
      %368 = vmatprep.mubr.f32.mxu0 0.0
      %369 = vmatmul.mubr.f32.gmra.mrb[0].mxu0 %v292
      %v370 = vpop.f32.mrb[0].mxu0
      %v371 = vadd.f32 0.0, %v370
      %v372 = vpop.f32.mrb[0].mxu0
      %373 = vmatprep.mubr.f32.mxu0 0.0
      %374 = vmatmul.mubr.f32.gmra.mrb[0].mxu0 %v295
      %v375 = vpop.f32.mrb[0].mxu0
      %v376 = vadd.f32 0.0, %v375
      %v377 = vpop.f32.mrb[0].mxu0
      %378 = vmatprep.mubr.f32.mxu0 0.0
      %379 = vmatmul.mubr.f32.gmra.mrb[0].mxu0 %v298
      %v380 = vpop.f32.mrb[0].mxu0
      %v381 = vadd.f32 0.0, %v380
      %v382 = vpop.f32.mrb[0].mxu0
      %383 = vdwg.mxu0
      %v384 = vld [vmem:[%s246] sm:$0xff]
      %v385 = vld [vmem:[%s246 + $0x8] sm:$0xff]
      %v386 = vld [vmem:[%s246 + $0x10] sm:$0x1f]
      %v387 = vld [vmem:[%s2] sm:$0x3]
      %vm388 = vcmask 15360
      %v390 = vsel %vm388, %v384, 0
      %v393 = vsel %vm388, %v385, 0
      %v396 = vsel %vm388, %v386, 0
      %vm398 = vcmask 1041408
      %v400 = vsel %vm398, %v387, 0
      %402 = vmatprep.subr.mxu0 0.0
      %403 = vmatpush1.msra.mxu0 %v400
      %404 = vmatprep.subr.mxu0 0.0
      %405 = vmatpush1.msra.mxu0 0.0
      %406 = vmatprep.subr.mxu0 0.0
      %407 = vmatpush1.msra.mxu0 0.0
      %408 = vmatprep.subr.mxu0 0.0
      %409 = vmatpush1.msra.mxu0 0.0
      %410 = vmatprep.subr.mxu0 0.0
      %411 = vmatpush1.msra.mxu0 0.0
      %412 = vmatprep.subr.mxu0 0.0
      %413 = vmatpush1.msra.mxu0 0.0
      %414 = vmatprep.subr.mxu0 0.0
      %415 = vmatpush1.msra.mxu0 0.0
      %416 = vmatprep.subr.mxu0 0.0
      %417 = vmatpush1.msra.mxu0 0.0
      %418 = vmatprep.subr.mxu0 0.0
      %419 = vmatpush1.msra.mxu0 0.0
      %420 = vmatprep.subr.mxu0 0.0
      %421 = vmatpush1.msra.mxu0 0.0
      %422 = vmatprep.subr.mxu0 0.0
      %423 = vmatpush1.msra.mxu0 0.0
      %424 = vmatprep.subr.mxu0 0.0
      %425 = vmatpush1.msra.mxu0 0.0
      %426 = vmatprep.subr.mxu0 0.0
      %427 = vmatpush1.msra.mxu0 0.0
      %428 = vmatprep.subr.mxu0 0.0
      %429 = vmatpush1.msra.mxu0 0.0
      %430 = vmatprep.subr.mxu0 0.0
      %431 = vmatpush1.msra.mxu0 0.0
      %432 = vmatprep.subr.mxu0 0.0
      %433 = vmatpush1.msra.mxu0 0.0
      %434 = vmatprep.subr.mxu0 0.0
      %435 = vmatpush1.msra.mxu0 0.0
      %436 = vmatprep.subr.mxu0 0.0
      %437 = vmatpush1.msra.mxu0 0.0
      %438 = vmatprep.subr.mxu0 0.0
      %439 = vmatpush1.msra.mxu0 0.0
      %440 = vmatprep.subr.mxu0 0.0
      %441 = vmatpush1.msra.mxu0 0.0
      %442 = vmatprep.subr.mxu0 0.0
      %443 = vmatpush1.msra.mxu0 0.0
      %444 = vmatprep.subr.mxu0 0.0
      %445 = vmatpush1.msra.mxu0 0.0
      %446 = vmatprep.subr.mxu0 0.0
      %447 = vmatpush1.msra.mxu0 0.0
      %448 = vmatprep.subr.mxu0 0.0
      %449 = vmatpush1.msra.mxu0 0.0
      %450 = vmatprep.subr.mxu0 0.0
      %451 = vmatpush1.msra.mxu0 0.0
      %452 = vmatprep.subr.mxu0 0.0
      %453 = vmatpush1.msra.mxu0 0.0
      %454 = vmatprep.subr.mxu0 0.0
      %455 = vmatpush1.msra.mxu0 0.0
      %456 = vmatprep.subr.mxu0 0.0
      %457 = vmatpush1.msra.mxu0 0.0
      %458 = vmatprep.subr.mxu0 0.0
      %459 = vmatpush1.msra.mxu0 0.0
      %460 = vmatprep.subr.mxu0 0.0
      %461 = vmatpush1.msra.mxu0 0.0
      %462 = vmatprep.subr.mxu0 0.0
      %463 = vmatpush1.msra.mxu0 0.0
      %464 = vmatprep.subr.mxu0 0.0
      %465 = vmatpush1.msra.mxu0 0.0
      %466 = vmatprep.mubr.f32.mxu0 0.0
      %467 = vmatmul.mubr.f32.gmra.mrb[0].mxu0 %v390
      %v468 = vpop.f32.mrb[0].mxu0
      %v469 = vadd.f32 0.0, %v468
      %v470 = vpop.f32.mrb[0].mxu0
      %471 = vmatprep.mubr.f32.mxu0 0.0
      %472 = vmatmul.mubr.f32.gmra.mrb[0].mxu0 %v393
      %v473 = vpop.f32.mrb[0].mxu0
      %v474 = vadd.f32 0.0, %v473
      %v475 = vpop.f32.mrb[0].mxu0
      %476 = vmatprep.mubr.f32.mxu0 0.0
      %477 = vmatmul.mubr.f32.gmra.mrb[0].mxu0 %v396
      %v478 = vpop.f32.mrb[0].mxu0
      %v479 = vadd.f32 0.0, %v478
      %v480 = vpop.f32.mrb[0].mxu0
      %481 = vdwg.mxu0
      %v482 = vld [vmem:[%s3] sm:$0x1]
      %v484 = vlaneseq
      %v485 = vshrl.u32 %v484, 7
      %v486 = vsub.s32 0, %v485
      %v487 = vrot.slane %v482, %v486
      %v490 = vsel %vm255, %v371, 0
      %v493 = vsel %vm255, %v376, 0
      %v496 = vsel %vm255, %v381, 0
      %v499 = vsel %vm300, %v479, 0
      %501 = vmatprep.subr.mxu0 0.0
      %502 = vmatpush1.msra.mxu0 %v469
      %503 = vmatprep.subr.mxu0 0.0
      %504 = vmatpush1.msra.mxu0 %v474
      %505 = vmatprep.subr.mxu0 0.0
      %506 = vmatpush1.msra.mxu0 %v499
      %507 = vmatprep.subr.mxu0 0.0
      %508 = vmatpush1.msra.mxu0 0.0
      %509 = vmatprep.subr.mxu0 0.0
      %510 = vmatpush1.msra.mxu0 0.0
      %511 = vmatprep.subr.mxu0 0.0
      %512 = vmatpush1.msra.mxu0 0.0
      %513 = vmatprep.subr.mxu0 0.0
      %514 = vmatpush1.msra.mxu0 0.0
      %515 = vmatprep.subr.mxu0 0.0
      %516 = vmatpush1.msra.mxu0 0.0
      %517 = vmatprep.subr.mxu0 0.0
      %518 = vmatpush1.msra.mxu0 0.0
      %519 = vmatprep.subr.mxu0 0.0
      %520 = vmatpush1.msra.mxu0 0.0
      %521 = vmatprep.subr.mxu0 0.0
      %522 = vmatpush1.msra.mxu0 0.0
      %523 = vmatprep.subr.mxu0 0.0
      %524 = vmatpush1.msra.mxu0 0.0
      %525 = vmatprep.subr.mxu0 0.0
      %526 = vmatpush1.msra.mxu0 0.0
      %527 = vmatprep.subr.mxu0 0.0
      %528 = vmatpush1.msra.mxu0 0.0
      %529 = vmatprep.subr.mxu0 0.0
      %530 = vmatpush1.msra.mxu0 0.0
      %531 = vmatprep.subr.mxu0 0.0
      %532 = vmatpush1.msra.mxu0 0.0
      %533 = vmatprep.subr.mxu0 0.0
      %534 = vmatpush1.msra.mxu0 0.0
      %535 = vmatprep.subr.mxu0 0.0
      %536 = vmatpush1.msra.mxu0 0.0
      %537 = vmatprep.subr.mxu0 0.0
      %538 = vmatpush1.msra.mxu0 0.0
      %539 = vmatprep.subr.mxu0 0.0
      %540 = vmatpush1.msra.mxu0 0.0
      %541 = vmatprep.subr.mxu0 0.0
      %542 = vmatpush1.msra.mxu0 0.0
      %543 = vmatprep.subr.mxu0 0.0
      %544 = vmatpush1.msra.mxu0 0.0
      %545 = vmatprep.subr.mxu0 0.0
      %546 = vmatpush1.msra.mxu0 0.0
      %547 = vmatprep.subr.mxu0 0.0
      %548 = vmatpush1.msra.mxu0 0.0
      %549 = vmatprep.subr.mxu0 0.0
      %550 = vmatpush1.msra.mxu0 0.0
      %551 = vmatprep.subr.mxu0 0.0
      %552 = vmatpush1.msra.mxu0 0.0
      %553 = vmatprep.subr.mxu0 0.0
      %554 = vmatpush1.msra.mxu0 0.0
      %555 = vmatprep.subr.mxu0 0.0
      %556 = vmatpush1.msra.mxu0 0.0
      %557 = vmatprep.subr.mxu0 0.0
      %558 = vmatpush1.msra.mxu0 0.0
      %559 = vmatprep.subr.mxu0 0.0
      %560 = vmatpush1.msra.mxu0 0.0
      %561 = vmatprep.subr.mxu0 0.0
      %562 = vmatpush1.msra.mxu0 0.0
      %563 = vmatprep.subr.mxu0 0.0
      %564 = vmatpush1.msra.mxu0 0.0
      %565 = vmatprep.mubr.f32.mxu0 0.0
      %566 = vmatmul.mubr.f32.gmra.mrb[0].mxu0 %v490
      %v567 = vpop.f32.mrb[0].mxu0
      %v568 = vadd.f32 %v487, %v567
      %v569 = vpop.f32.mrb[0].mxu0
      %570 = vmatprep.mubr.f32.mxu0 0.0
      %571 = vmatmul.mubr.f32.gmra.mrb[0].mxu0 %v493
      %v572 = vpop.f32.mrb[0].mxu0
      %v573 = vadd.f32 %v487, %v572
      %v574 = vpop.f32.mrb[0].mxu0
      %575 = vmatprep.mubr.f32.mxu0 0.0
      %576 = vmatmul.mubr.f32.gmra.mrb[0].mxu0 %v496
      %v577 = vpop.f32.mrb[0].mxu0
      %v578 = vadd.f32 %v487, %v577
      %v579 = vpop.f32.mrb[0].mxu0
      %580 = vdwg.mxu0
      %v581 = vmax.f32 %v568, 0.0
      %v582 = vmax.f32 %v573, 0.0
      %v583 = vmax.f32 %v578, 0.0
      %v584 = vld [vmem:[%s4] sm:$0xf]
      %vm585 = vcmask 31744
      %v587 = vsel %vm585, %v581, 0
      %v590 = vsel %vm585, %v582, 0
      %v593 = vsel %vm585, %v583, 0
      %vm595 = vcmask 1043456
      %v597 = vsel %vm595, %v584, 0
      %599 = vmatprep.subr.mxu0 0.0
      %600 = vmatpush1.msra.mxu0 %v597
      %601 = vmatprep.subr.mxu0 0.0
      %602 = vmatpush1.msra.mxu0 0.0
      %603 = vmatprep.subr.mxu0 0.0
      %604 = vmatpush1.msra.mxu0 0.0
      %605 = vmatprep.subr.mxu0 0.0
      %606 = vmatpush1.msra.mxu0 0.0
      %607 = vmatprep.subr.mxu0 0.0
      %608 = vmatpush1.msra.mxu0 0.0
      %609 = vmatprep.subr.mxu0 0.0
      %610 = vmatpush1.msra.mxu0 0.0
      %611 = vmatprep.subr.mxu0 0.0
      %612 = vmatpush1.msra.mxu0 0.0
      %613 = vmatprep.subr.mxu0 0.0
      %614 = vmatpush1.msra.mxu0 0.0
      %615 = vmatprep.subr.mxu0 0.0
      %616 = vmatpush1.msra.mxu0 0.0
      %617 = vmatprep.subr.mxu0 0.0
      %618 = vmatpush1.msra.mxu0 0.0
      %619 = vmatprep.subr.mxu0 0.0
      %620 = vmatpush1.msra.mxu0 0.0
      %621 = vmatprep.subr.mxu0 0.0
      %622 = vmatpush1.msra.mxu0 0.0
      %623 = vmatprep.subr.mxu0 0.0
      %624 = vmatpush1.msra.mxu0 0.0
      %625 = vmatprep.subr.mxu0 0.0
      %626 = vmatpush1.msra.mxu0 0.0
      %627 = vmatprep.subr.mxu0 0.0
      %628 = vmatpush1.msra.mxu0 0.0
      %629 = vmatprep.subr.mxu0 0.0
      %630 = vmatpush1.msra.mxu0 0.0
      %631 = vmatprep.subr.mxu0 0.0
      %632 = vmatpush1.msra.mxu0 0.0
      %633 = vmatprep.subr.mxu0 0.0
      %634 = vmatpush1.msra.mxu0 0.0
      %635 = vmatprep.subr.mxu0 0.0
      %636 = vmatpush1.msra.mxu0 0.0
      %637 = vmatprep.subr.mxu0 0.0
      %638 = vmatpush1.msra.mxu0 0.0
      %639 = vmatprep.subr.mxu0 0.0
      %640 = vmatpush1.msra.mxu0 0.0
      %641 = vmatprep.subr.mxu0 0.0
      %642 = vmatpush1.msra.mxu0 0.0
      %643 = vmatprep.subr.mxu0 0.0
      %644 = vmatpush1.msra.mxu0 0.0
      %645 = vmatprep.subr.mxu0 0.0
      %646 = vmatpush1.msra.mxu0 0.0
      %647 = vmatprep.subr.mxu0 0.0
      %648 = vmatpush1.msra.mxu0 0.0
      %649 = vmatprep.subr.mxu0 0.0
      %650 = vmatpush1.msra.mxu0 0.0
      %651 = vmatprep.subr.mxu0 0.0
      %652 = vmatpush1.msra.mxu0 0.0
      %653 = vmatprep.subr.mxu0 0.0
      %654 = vmatpush1.msra.mxu0 0.0
      %655 = vmatprep.subr.mxu0 0.0
      %656 = vmatpush1.msra.mxu0 0.0
      %657 = vmatprep.subr.mxu0 0.0
      %658 = vmatpush1.msra.mxu0 0.0
      %659 = vmatprep.subr.mxu0 0.0
      %660 = vmatpush1.msra.mxu0 0.0
      %661 = vmatprep.subr.mxu0 0.0
      %662 = vmatpush1.msra.mxu0 0.0
      %663 = vmatprep.mubr.f32.mxu0 0.0
      %664 = vmatmul.mubr.f32.gmra.mrb[0].mxu0 %v587
      %v665 = vpop.f32.mrb[0].mxu0
      %v666 = vadd.f32 0.0, %v665
      %v667 = vpop.f32.mrb[0].mxu0
      %668 = vmatprep.mubr.f32.mxu0 0.0
      %669 = vmatmul.mubr.f32.gmra.mrb[0].mxu0 %v590
      %v670 = vpop.f32.mrb[0].mxu0
      %v671 = vadd.f32 0.0, %v670
      %v672 = vpop.f32.mrb[0].mxu0
      %673 = vmatprep.mubr.f32.mxu0 0.0
      %674 = vmatmul.mubr.f32.gmra.mrb[0].mxu0 %v593
      %v675 = vpop.f32.mrb[0].mxu0
      %v676 = vadd.f32 0.0, %v675
      %v677 = vpop.f32.mrb[0].mxu0
      %678 = vdwg.mxu0
      %v679 = vld [vmem:[%s5] sm:$0x1]
      %v681 = vlaneseq
      %v682 = vshrl.u32 %v681, 7
      %v683 = vsub.s32 0, %v682
      %v684 = vrot.slane %v679, %v683
      %v687 = vsel %vm300, %v676, 0
      %689 = vmatprep.subr.mxu0 0.0
      %690 = vmatpush1.msra.mxu0 %v666
      %691 = vmatprep.subr.mxu0 0.0
      %692 = vmatpush1.msra.mxu0 %v671
      %693 = vmatprep.subr.mxu0 0.0
      %694 = vmatpush1.msra.mxu0 %v687
      %695 = vmatprep.subr.mxu0 0.0
      %696 = vmatpush1.msra.mxu0 0.0
      %697 = vmatprep.subr.mxu0 0.0
      %698 = vmatpush1.msra.mxu0 0.0
      %699 = vmatprep.subr.mxu0 0.0
      %700 = vmatpush1.msra.mxu0 0.0
      %701 = vmatprep.subr.mxu0 0.0
      %702 = vmatpush1.msra.mxu0 0.0
      %703 = vmatprep.subr.mxu0 0.0
      %704 = vmatpush1.msra.mxu0 0.0
      %705 = vmatprep.subr.mxu0 0.0
      %706 = vmatpush1.msra.mxu0 0.0
      %707 = vmatprep.subr.mxu0 0.0
      %708 = vmatpush1.msra.mxu0 0.0
      %709 = vmatprep.subr.mxu0 0.0
      %710 = vmatpush1.msra.mxu0 0.0
      %711 = vmatprep.subr.mxu0 0.0
      %712 = vmatpush1.msra.mxu0 0.0
      %713 = vmatprep.subr.mxu0 0.0
      %714 = vmatpush1.msra.mxu0 0.0
      %715 = vmatprep.subr.mxu0 0.0
      %716 = vmatpush1.msra.mxu0 0.0
      %717 = vmatprep.subr.mxu0 0.0
      %718 = vmatpush1.msra.mxu0 0.0
      %719 = vmatprep.subr.mxu0 0.0
      %720 = vmatpush1.msra.mxu0 0.0
      %721 = vmatprep.subr.mxu0 0.0
      %722 = vmatpush1.msra.mxu0 0.0
      %723 = vmatprep.subr.mxu0 0.0
      %724 = vmatpush1.msra.mxu0 0.0
      %725 = vmatprep.subr.mxu0 0.0
      %726 = vmatpush1.msra.mxu0 0.0
      %727 = vmatprep.subr.mxu0 0.0
      %728 = vmatpush1.msra.mxu0 0.0
      %729 = vmatprep.subr.mxu0 0.0
      %730 = vmatpush1.msra.mxu0 0.0
      %731 = vmatprep.subr.mxu0 0.0
      %732 = vmatpush1.msra.mxu0 0.0
      %733 = vmatprep.subr.mxu0 0.0
      %734 = vmatpush1.msra.mxu0 0.0
      %735 = vmatprep.subr.mxu0 0.0
      %736 = vmatpush1.msra.mxu0 0.0
      %737 = vmatprep.subr.mxu0 0.0
      %738 = vmatpush1.msra.mxu0 0.0
      %739 = vmatprep.subr.mxu0 0.0
      %740 = vmatpush1.msra.mxu0 0.0
      %741 = vmatprep.subr.mxu0 0.0
      %742 = vmatpush1.msra.mxu0 0.0
      %743 = vmatprep.subr.mxu0 0.0
      %744 = vmatpush1.msra.mxu0 0.0
      %745 = vmatprep.subr.mxu0 0.0
      %746 = vmatpush1.msra.mxu0 0.0
      %747 = vmatprep.subr.mxu0 0.0
      %748 = vmatpush1.msra.mxu0 0.0
      %749 = vmatprep.subr.mxu0 0.0
      %750 = vmatpush1.msra.mxu0 0.0
      %751 = vmatprep.subr.mxu0 0.0
      %752 = vmatpush1.msra.mxu0 0.0
      %753 = vmatprep.mubr.f32.mxu0 0.0
      %754 = vmatmul.mubr.f32.gmra.mrb[0].mxu0 %v490
      %v755 = vpop.f32.mrb[0].mxu0
      %v756 = vadd.f32 %v684, %v755
      %v757 = vpop.f32.mrb[0].mxu0
      %758 = vmatprep.mubr.f32.mxu0 0.0
      %759 = vmatmul.mubr.f32.gmra.mrb[0].mxu0 %v493
      %v760 = vpop.f32.mrb[0].mxu0
      %v761 = vadd.f32 %v684, %v760
      %v762 = vpop.f32.mrb[0].mxu0
      %763 = vmatprep.mubr.f32.mxu0 0.0
      %764 = vmatmul.mubr.f32.gmra.mrb[0].mxu0 %v496
      %v765 = vpop.f32.mrb[0].mxu0
      %v766 = vadd.f32 %v684, %v765
      %v767 = vpop.f32.mrb[0].mxu0
      %768 = vdwg.mxu0
      %v769 = vmax.f32 %v756, 0.0
      %v770 = vmax.f32 %v761, 0.0
      %v771 = vmax.f32 %v766, 0.0
      %772 = vst.msk [vmem:[%s251] sm:$0xff] %vm388, %v769
      %773 = vst.msk [vmem:[%s251 + $0x8] sm:$0xff] %vm388, %v770
      %vm774 = vcmask 12288
      %775 = vst.msk [vmem:[%s251 + $0x10] sm:$0x1f] %vm774, %v771
      %p776 = scmp.lt.s32.totalorder %s17, 1
      %s777 = scalar_select %p776, %s17, 1
      %s778 = smul.addr %s777, 3
      %s779 = smul.addr %s778, 8
      %s780 = scalar_lea.vmem %s6, %s779
      // Predicated region
      $region45: #{graphnet_forward.1} parent=43 // pred_check
        %p781 = pneg %p166
      $region46: #{graphnet_forward.1} parent=43 // pred_check_branch
        %783 = sbr.rel (%p781) target = $region48
      $region47: #{graphnet_forward.1} parent=43 // pred_region
        _
      $region48: #{graphnet_forward.1} parent=43 // pred_fallthru
        _
    $region44: #{graphnet_forward.1} parent=5 // pred_fallthru
      _
    %p784 = scmp.le.s32.totalorder 2, %s12
    // Predicated region
    $region49: #{graphnet_forward.1} parent=5 // pred_check
      %p785 = pneg %p784
    $region50: #{graphnet_forward.1} parent=5 // pred_check_branch
      %787 = sbr.rel (%p785) target = $region52
    $region51: #{graphnet_forward.1} parent=5 // pred_region
      %s788 = ssub.s32 %s12, 2
      // Predicated region
      $region53: #{graphnet_forward.1} parent=51 // pred_check
        %p789 = pneg %p172
      $region54: #{graphnet_forward.1} parent=51 // pred_check_branch
        %791 = sbr.rel (%p789) target = $region56
      $region55: #{graphnet_forward.1} parent=51 // pred_region
        %p792 = scmp.lt.s32.totalorder %s18, 1
        %s793 = scalar_select %p792, %s18, 1
        %s794 = smul.addr %s793, 3
        %s795 = smul.addr %s794, 8
        %s796 = scalar_lea.vmem %s6, %s795
      $region56: #{graphnet_forward.1} parent=51 // pred_fallthru
        _
    $region52: #{graphnet_forward.1} parent=5 // pred_fallthru
      _
  $region6: #{graphnet_forward.1} parent=0 // loop_footer
    %s16 = sadd.s32 1, %s12
  $region7: #{graphnet_forward.1} parent=0 // loop_footer_branch
    %11 = sbr.rel target = $region3
  $region8: #{graphnet_forward.1} parent=0 // loop_exit
    _

</llo_original>
